<compile_context>
chip_gen: v5e
topology: v5e:2x2
jax: 0.10.0
libtpu: 0.0.40
codegen_flags: <defaults>
</compile_context>

<pallas_src>
import functools

import jax
import jax.numpy as jnp
from jax import lax
from jax.experimental import pallas as pl
from jax.experimental.pallas import tpu as pltpu


def _round_up(x, m):
    return (x + m - 1) // m * m


def _cnn_text_kernel(ids_ref, tbl_ref, w_ref, b_ref, o_ref, x_vmem, sem, *,
                     seq_len, widths, filters, c_pad):
    """One batch tile: DMA-gather embedding rows -> one MXU matmul over all conv
    taps -> aligned shift-add -> bias/ReLU -> masked max over time."""
    tb = o_ref.shape[0]
    n_tok = tb * seq_len
    max_w = max(widths)
    base = pl.program_id(0) * n_tok

    # ---- fused embedding gather: per-token row DMA, 2-slot pipelined ---------
    def row_copy(tok_idx, dst_row, slot):
        return pltpu.make_async_copy(
            tbl_ref.at[pl.ds(tok_idx, 1)],      # (1, D) row in HBM
            x_vmem.at[pl.ds(dst_row, 1)],       # (1, D) row in VMEM scratch
            sem.at[slot])

    row_copy(ids_ref[base], 0, 0).start()

    @pl.loop(0, n_tok)
    def _(t):
        slot = t & 1

        @pl.when(t + 1 < n_tok)
        def _():
            row_copy(ids_ref[base + t + 1], t + 1, 1 - slot).start()

        # Wait for row t (descriptor only carries shape + semaphore slot).
        pltpu.make_async_copy(
            tbl_ref.at[pl.ds(0, 1)], x_vmem.at[pl.ds(t, 1)], sem.at[slot]).wait()

    # ---- single MXU matmul over all widths / taps ----------------------------
    # x: (n_tok, D) bf16; w: (D, max_w*C_pad) bf16 -- tap dw of every width
    # occupies lanes [dw*C_pad, (dw+1)*C_pad), already in the output layout.
    x = x_vmem[...].astype(jnp.bfloat16)
    y = jnp.dot(x, w_ref[...], preferred_element_type=jnp.float32)

    # ---- shift-add across taps: max_w-1 full-width, 128-aligned lane slices --
    acc = y[:, 0:c_pad]
    for dw in range(1, max_w):
        blk = y[:, dw * c_pad:(dw + 1) * c_pad]
        # result[m] = blk[m + dw]; tail rows are invalid and masked below.
        # TODO(synk): pltpu.roll to move this shift onto the XLU slot.
        shifted = jnp.concatenate(
            [blk[dw:, :], jnp.zeros((dw, c_pad), jnp.float32)], axis=0)
        acc = acc + shifted

    # Bias + ReLU in f32 (safe on v5e); zero bias keeps the padding lanes at 0.
    acc = jnp.maximum(acc + b_ref[...], 0.0)

    # ---- mask invalid conv positions (l > S - w) and max over time -----------
    acc = acc.reshape(tb, seq_len, c_pad)
    pos = lax.broadcasted_iota(jnp.int32, (tb, seq_len, c_pad), 1)
    lane = lax.broadcasted_iota(jnp.int32, (tb, seq_len, c_pad), 2)
    valid_len = jnp.full((tb, seq_len, c_pad), seq_len, jnp.int32)
    for i, w in enumerate(widths):
        in_block = (lane >= i * filters) & (lane < (i + 1) * filters)
        valid_len = jnp.where(in_block, seq_len - w + 1, valid_len)
    acc = jnp.where(pos < valid_len, acc, 0.0)   # post-ReLU values are >= 0
    o_ref[...] = jnp.max(acc, axis=1)            # (TB, C_pad), lane-dense store


def prepare_cnn_text(params):
    """One-time (hoisted) packing of CNN_Text parameters into the fused kernel
    layout.  Do NOT call this per forward step."""
    widths = tuple(params["widths"])
    convs = params["convs"]
    filters = convs[0][0].shape[2]
    embed_dim = params["embed"].shape[1]
    max_w = max(widths)
    out_width = len(widths) * filters
    c_pad = _round_up(out_width, 128)

    # dw-major fused weight matrix: tap dw of width i sits at lanes
    # [dw*c_pad + i*filters, dw*c_pad + (i+1)*filters); everything else zero.
    w_all = jnp.zeros((embed_dim, max_w * c_pad), jnp.float32)
    b_all = jnp.zeros((1, c_pad), jnp.float32)
    for i, (w, (cw, cb)) in enumerate(zip(widths, convs)):
        for dw in range(w):
            col = dw * c_pad + i * filters
            w_all = w_all.at[:, col:col + filters].set(cw[dw])
        b_all = b_all.at[0, i * filters:(i + 1) * filters].set(cb)

    # Embedding table stays in HBM; values rounded to bf16 (matmul precision)
    # but stored as f32 so single-row DMAs hit clean 32-bit VMEM sublanes.
    # TODO(synk): store bf16 and bitcast-pack row pairs to u32 to halve bytes.
    table = params["embed"].astype(jnp.bfloat16).astype(jnp.float32)

    return dict(table=table, w_all=w_all.astype(jnp.bfloat16), b_all=b_all,
                widths=widths, filters=filters, c_pad=c_pad, out_width=out_width)


def _choose_batch_tile(batch, seq_len, embed_dim, n_mm_cols, c_pad, *,
                       vmem_budget_bytes=16 * 1024 * 1024, target_tiles=4):
    """Largest batch tile (multiple of 8) whose per-step footprint fits the VMEM
    budget, aiming for >= target_tiles grid steps so both v7x TensorCores and
    the output-DMA pipeline have work to overlap."""
    if batch <= 8:
        return batch                              # single full-array tile

    def step_bytes(tb):
        n_tok = tb * seq_len
        return (n_tok * embed_dim * 4             # f32 gather scratch
                + n_tok * n_mm_cols * 4           # f32 matmul result
                + 2 * n_tok * c_pad * 4           # shift-add accumulator + temp
                + 2 * tb * c_pad * 4)             # double-buffered output block

    tb = min(_round_up(pl.cdiv(batch, target_tiles), 8), _round_up(batch, 8))
    while tb > 8 and step_bytes(tb) > vmem_budget_bytes:
        tb -= 8
    return tb


def cnn_text_forward(x_ids, prepared):
    """CNN_Text forward for int32 token ids (B, S), using pre-packed params."""
    table, w_all, b_all = prepared["table"], prepared["w_all"], prepared["b_all"]
    widths, filters, c_pad = prepared["widths"], prepared["filters"], prepared["c_pad"]
    batch, seq_len = x_ids.shape
    embed_dim = table.shape[1]

    tb = _choose_batch_tile(batch, seq_len, embed_dim, w_all.shape[1], c_pad)
    n_tiles = pl.cdiv(batch, tb)
    b_pad = n_tiles * tb
    if b_pad != batch:
        # Padding rows gather token 0, compute garbage and are sliced off below.
        x_ids = jnp.concatenate(
            [x_ids, jnp.zeros((b_pad - batch, seq_len), x_ids.dtype)], axis=0)
    ids_flat = x_ids.reshape(-1).astype(jnp.int32)        # -> SMEM scalar prefetch

    kernel = functools.partial(_cnn_text_kernel, seq_len=seq_len, widths=widths,
                               filters=filters, c_pad=c_pad)

    out = pl.pallas_call(
        kernel,
        out_shape=jax.ShapeDtypeStruct((b_pad, c_pad), jnp.float32),
        grid_spec=pltpu.PrefetchScalarGridSpec(
            num_scalar_prefetch=1,                 # token ids live in SMEM
            grid=(n_tiles,),
            in_specs=[
                pl.BlockSpec(memory_space=pl.ANY),                  # table (HBM)
                pl.BlockSpec(w_all.shape, lambda b, ids: (0, 0)),   # VMEM-resident
                pl.BlockSpec(b_all.shape, lambda b, ids: (0, 0)),   # VMEM-resident
            ],
            out_specs=pl.BlockSpec((tb, c_pad), lambda b, ids: (b, 0)),
            scratch_shapes=[
                pltpu.VMEM((tb * seq_len, embed_dim), jnp.float32),  # gathered rows
                pltpu.SemaphoreType.DMA((2,)),                       # 2-slot pipeline
            ],
        ),
        compiler_params=pltpu.CompilerParams(
            dimension_semantics=("parallel",),
            vmem_limit_bytes=32 * 1024 * 1024,
        ),
    )(ids_flat, table, w_all, b_all)

    return out[:batch, :prepared["out_width"]]


def init_params(key, embed_num, embed_dim, widths, filters):
    keys = jax.random.split(key, 1 + 2 * len(widths))
    embed = jax.random.normal(keys[0], (embed_num, embed_dim), jnp.float32) * 0.1
    convs = []
    for i, w in enumerate(widths):
        kw = jax.random.normal(
            keys[1 + 2 * i], (w, embed_dim, filters), jnp.float32) * 0.1
        kb = jax.random.normal(keys[2 + 2 * i], (filters,), jnp.float32) * 0.1
        convs.append((kw, kb))
    return {"embed": embed, "convs": convs, "widths": tuple(widths)}


def _reference_forward(x_ids, params):
    """Pure-JAX reference mirroring the PyTorch module, computed in f32 on the
    same bf16-rounded embedding/weight values the kernel consumes."""
    embed = params["embed"].astype(jnp.bfloat16).astype(jnp.float32)
    x_emb = jnp.take(embed, x_ids, axis=0)                 # (B, S, D)
    _, seq_len, _ = x_emb.shape
    outs = []
    for w, (cw, cb) in zip(params["widths"], params["convs"]):
        cw = cw.astype(jnp.bfloat16).astype(jnp.float32)
        valid = seq_len - w + 1
        windows = jnp.stack([x_emb[:, t:t + valid, :] for t in range(w)], axis=2)
        conv = jnp.einsum("blwd,wdc->blc", windows, cw,
                          precision=jax.lax.Precision.HIGHEST) + cb
        outs.append(jnp.max(jnp.maximum(conv, 0.0), axis=1))
    return jnp.concatenate(outs, axis=1)


if __name__ == "__main__":
    # Small shapes consistent with the module.
    embed_num, embed_dim = 50, 32
    widths, filters = [3, 4, 5], 16
    batch, seq_len = 2, 8

    key = jax.random.PRNGKey(0)
    k_param, k_ids = jax.random.split(key)
    params = init_params(k_param, embed_num, embed_dim, widths, filters)
    x_ids = jax.random.randint(k_ids, (batch, seq_len), 0, embed_num, jnp.int32)

    prepared = prepare_cnn_text(params)        # hoisted one-time weight packing
    out = jax.block_until_ready(cnn_text_forward(x_ids, prepared))

    assert out.shape == (batch, filters * len(widths)), out.shape

    ref = _reference_forward(x_ids, params)
    max_err = float(jnp.max(jnp.abs(out - ref)))
    assert jnp.allclose(out, ref, atol=2e-3, rtol=2e-3), max_err

    print("KERNEL_OK")
</pallas_src>

<mosaic_0001>
module attributes {stable_mosaic.version = 11 : i64} {
  func.func @_cnn_text_kernel(%arg0: i32, %arg1: memref<16xi32, #tpu.memory_space<smem>>, %arg2: memref<50x32xf32, #tpu.memory_space<any>>, %arg3: memref<32x640xbf16, #tpu.memory_space<vmem>>, %arg4: memref<1x128xf32, #tpu.memory_space<vmem>>, %arg5: memref<2x128xf32, #tpu.memory_space<vmem>>, %arg6: memref<16x32xf32, #tpu.memory_space<vmem>>, %arg7: memref<2x!tpu.dma_semaphore, #tpu.memory_space<semaphore_mem>>) attributes {dimension_semantics = [#tpu.dimension_semantics<parallel>], iteration_bounds = array<i64: 1>, scalar_prefetch = 1 : i64, scratch_operands = 2 : i64, tpu.core_type = #tpu.core_type<tc>, window_params = [{}, {pipeline_mode = #tpu.pipeline_mode<synchronous>, transform_indices = @transform_1, window_bounds = array<i64: 32, 640>}, {pipeline_mode = #tpu.pipeline_mode<synchronous>, transform_indices = @transform_2, window_bounds = array<i64: 1, 128>}, {transform_indices = @transform_3, window_bounds = array<i64: 2, 128>}]} {
    %c16_i32 = arith.constant 16 : i32
    %0 = arith.muli %arg0, %c16_i32 : i32
    %1 = arith.index_cast %0 : i32 to index
    %2 = memref.load %arg1[%1] : memref<16xi32, #tpu.memory_space<smem>>
    %c0_i32 = arith.constant 0 : i32
    %c0_i32_0 = arith.constant 0 : i32
    %3 = tpu.memref_slice %arg2[%2, %c0_i32_0] : memref<50x32xf32, #tpu.memory_space<any>> -> memref<1x32xf32, #tpu.memory_space<any>>
    %c0_i32_1 = arith.constant 0 : i32
    %c0_i32_2 = arith.constant 0 : i32
    %4 = tpu.memref_slice %arg6[%c0_i32_1, %c0_i32_2] : memref<16x32xf32, #tpu.memory_space<vmem>> -> memref<1x32xf32, #tpu.memory_space<vmem>>
    %5 = tpu.memref_slice %arg7[%c0_i32] : memref<2x!tpu.dma_semaphore, #tpu.memory_space<semaphore_mem>> -> memref<1x!tpu.dma_semaphore, #tpu.memory_space<semaphore_mem>>
    %6 = tpu.memref_squeeze %5 : memref<1x!tpu.dma_semaphore, #tpu.memory_space<semaphore_mem>> -> memref<!tpu.dma_semaphore, #tpu.memory_space<semaphore_mem>>
    tpu.enqueue_dma source(%3 : memref<1x32xf32, #tpu.memory_space<any>>) target(%4 : memref<1x32xf32, #tpu.memory_space<vmem>>) target_semaphore(%6 : memref<!tpu.dma_semaphore, #tpu.memory_space<semaphore_mem>>)
    %c0_i32_3 = arith.constant 0 : i32
    %c16_i32_4 = arith.constant 16 : i32
    %7 = arith.addi %c0_i32_3, %c16_i32_4 : i32
    %c1_i32 = arith.constant 1 : i32
    scf.for %arg8 = %c0_i32_3 to %7 step %c1_i32  : i32 {
      %c1_i32_24 = arith.constant 1 : i32
      %68 = arith.muli %arg8, %c1_i32_24 : i32
      %c0_i32_25 = arith.constant 0 : i32
      %69 = arith.addi %c0_i32_25, %68 : i32
      %c1_i32_26 = arith.constant 1 : i32
      %70 = arith.andi %69, %c1_i32_26 : i32
      %c1_i32_27 = arith.constant 1 : i32
      %71 = arith.addi %69, %c1_i32_27 : i32
      %c16_i32_28 = arith.constant 16 : i32
      %72 = arith.cmpi slt, %71, %c16_i32_28 : i32
      %73 = arith.extui %72 : i1 to i32
      %c0_i32_29 = arith.constant 0 : i32
      %74 = arith.cmpi ne, %73, %c0_i32_29 : i32
      scf.if %74 {
        %79 = arith.addi %0, %69 : i32
        %c1_i32_33 = arith.constant 1 : i32
        %80 = arith.addi %79, %c1_i32_33 : i32
        %81 = arith.index_cast %80 : i32 to index
        %82 = memref.load %arg1[%81] : memref<16xi32, #tpu.memory_space<smem>>
        %c1_i32_34 = arith.constant 1 : i32
        %83 = arith.addi %69, %c1_i32_34 : i32
        %c1_i32_35 = arith.constant 1 : i32
        %84 = arith.subi %c1_i32_35, %70 : i32
        %c0_i32_36 = arith.constant 0 : i32
        %85 = tpu.memref_slice %arg2[%82, %c0_i32_36] : memref<50x32xf32, #tpu.memory_space<any>> -> memref<1x32xf32, #tpu.memory_space<any>>
        %c0_i32_37 = arith.constant 0 : i32
        %86 = tpu.memref_slice %arg6[%83, %c0_i32_37] : memref<16x32xf32, #tpu.memory_space<vmem>> -> memref<1x32xf32, #tpu.memory_space<vmem>>
        %87 = tpu.memref_slice %arg7[%84] : memref<2x!tpu.dma_semaphore, #tpu.memory_space<semaphore_mem>> -> memref<1x!tpu.dma_semaphore, #tpu.memory_space<semaphore_mem>>
        %88 = tpu.memref_squeeze %87 : memref<1x!tpu.dma_semaphore, #tpu.memory_space<semaphore_mem>> -> memref<!tpu.dma_semaphore, #tpu.memory_space<semaphore_mem>>
        tpu.enqueue_dma source(%85 : memref<1x32xf32, #tpu.memory_space<any>>) target(%86 : memref<1x32xf32, #tpu.memory_space<vmem>>) target_semaphore(%88 : memref<!tpu.dma_semaphore, #tpu.memory_space<semaphore_mem>>)
      } else {
      }
      %c0_i32_30 = arith.constant 0 : i32
      %c0_i32_31 = arith.constant 0 : i32
      %75 = tpu.memref_slice %arg2[%c0_i32_30, %c0_i32_31] : memref<50x32xf32, #tpu.memory_space<any>> -> memref<1x32xf32, #tpu.memory_space<any>>
      %c0_i32_32 = arith.constant 0 : i32
      %76 = tpu.memref_slice %arg6[%69, %c0_i32_32] : memref<16x32xf32, #tpu.memory_space<vmem>> -> memref<1x32xf32, #tpu.memory_space<vmem>>
      %77 = tpu.memref_slice %arg7[%70] : memref<2x!tpu.dma_semaphore, #tpu.memory_space<semaphore_mem>> -> memref<1x!tpu.dma_semaphore, #tpu.memory_space<semaphore_mem>>
      %78 = tpu.memref_squeeze %77 : memref<1x!tpu.dma_semaphore, #tpu.memory_space<semaphore_mem>> -> memref<!tpu.dma_semaphore, #tpu.memory_space<semaphore_mem>>
      tpu.wait_dma2 semaphore(%78 : memref<!tpu.dma_semaphore, #tpu.memory_space<semaphore_mem>>) src(%75 : memref<1x32xf32, #tpu.memory_space<any>>) dst(%76 : memref<1x32xf32, #tpu.memory_space<vmem>>)
    }
    %c16_i32_5 = arith.constant 16 : i32
    %c0 = arith.constant 0 : index
    %c0_6 = arith.constant 0 : index
    %8 = vector.load %arg6[%c0, %c0_6] : memref<16x32xf32, #tpu.memory_space<vmem>>, vector<16x32xf32>
    %9 = arith.truncf %8 : vector<16x32xf32> to vector<16x32xbf16>
    %c0_7 = arith.constant 0 : index
    %c0_8 = arith.constant 0 : index
    %10 = vector.load %arg3[%c0_7, %c0_8] : memref<32x640xbf16, #tpu.memory_space<vmem>>, vector<32x640xbf16>
    %cst = arith.constant dense<0.000000e+00> : vector<16x640xf32>
    %11 = tpu.matmul %9, %10, %cst {dimension_numbers = #tpu.dot_dimension_numbers<[1], [0], [0], [1], [0, 0, 1, 1], [], []>} : vector<16x32xbf16>, vector<32x640xbf16>, vector<16x640xf32> -> vector<16x640xf32>
    %12 = vector.extract_strided_slice %11 {offsets = [0, 0], sizes = [16, 128], strides = [1, 1]} : vector<16x640xf32> to vector<16x128xf32>
    %13 = vector.extract_strided_slice %11 {offsets = [0, 128], sizes = [16, 128], strides = [1, 1]} : vector<16x640xf32> to vector<16x128xf32>
    %14 = vector.extract_strided_slice %13 {offsets = [1, 0], sizes = [15, 128], strides = [1, 1]} : vector<16x128xf32> to vector<15x128xf32>
    %cst_9 = arith.constant 0.000000e+00 : f32
    %15 = vector.broadcast %cst_9 : f32 to vector<1x128xf32>
    %16 = tpu.concatenate %14, %15 in 0 : vector<15x128xf32>, vector<1x128xf32> -> vector<16x128xf32>
    %17 = arith.addf %12, %16 : vector<16x128xf32>
    %18 = vector.extract_strided_slice %11 {offsets = [0, 256], sizes = [16, 128], strides = [1, 1]} : vector<16x640xf32> to vector<16x128xf32>
    %19 = vector.extract_strided_slice %18 {offsets = [2, 0], sizes = [14, 128], strides = [1, 1]} : vector<16x128xf32> to vector<14x128xf32>
    %cst_10 = arith.constant 0.000000e+00 : f32
    %20 = vector.broadcast %cst_10 : f32 to vector<2x128xf32>
    %21 = tpu.concatenate %19, %20 in 0 : vector<14x128xf32>, vector<2x128xf32> -> vector<16x128xf32>
    %22 = arith.addf %17, %21 : vector<16x128xf32>
    %23 = vector.extract_strided_slice %11 {offsets = [0, 384], sizes = [16, 128], strides = [1, 1]} : vector<16x640xf32> to vector<16x128xf32>
    %24 = vector.extract_strided_slice %23 {offsets = [3, 0], sizes = [13, 128], strides = [1, 1]} : vector<16x128xf32> to vector<13x128xf32>
    %cst_11 = arith.constant 0.000000e+00 : f32
    %25 = vector.broadcast %cst_11 : f32 to vector<3x128xf32>
    %26 = tpu.concatenate %24, %25 in 0 : vector<13x128xf32>, vector<3x128xf32> -> vector<16x128xf32>
    %27 = arith.addf %22, %26 : vector<16x128xf32>
    %28 = vector.extract_strided_slice %11 {offsets = [0, 512], sizes = [16, 128], strides = [1, 1]} : vector<16x640xf32> to vector<16x128xf32>
    %29 = vector.extract_strided_slice %28 {offsets = [4, 0], sizes = [12, 128], strides = [1, 1]} : vector<16x128xf32> to vector<12x128xf32>
    %cst_12 = arith.constant 0.000000e+00 : f32
    %30 = vector.broadcast %cst_12 : f32 to vector<4x128xf32>
    %31 = tpu.concatenate %29, %30 in 0 : vector<12x128xf32>, vector<4x128xf32> -> vector<16x128xf32>
    %32 = arith.addf %27, %31 : vector<16x128xf32>
    %c0_13 = arith.constant 0 : index
    %c0_14 = arith.constant 0 : index
    %33 = vector.load %arg4[%c0_13, %c0_14] : memref<1x128xf32, #tpu.memory_space<vmem>>, vector<1x128xf32>
    %34 = vector.broadcast %33 : vector<1x128xf32> to vector<16x128xf32>
    %35 = arith.addf %32, %34 : vector<16x128xf32>
    %cst_15 = arith.constant 0.000000e+00 : f32
    %36 = vector.broadcast %cst_15 : f32 to vector<16x128xf32>
    %37 = arith.maximumf %35, %36 : vector<16x128xf32>
    %38 = vector.shape_cast %37 : vector<16x128xf32> to vector<2x8x128xf32>
    %39 = tpu.iota {dimensions = array<i32: 1>} : vector<2x8x128xi32>
    %40 = tpu.iota {dimensions = array<i32: 2>} : vector<2x8x128xi32>
    %c8_i32 = arith.constant 8 : i32
    %41 = vector.broadcast %c8_i32 : i32 to vector<2x8x128xi32>
    %c0_i32_16 = arith.constant 0 : i32
    %42 = vector.broadcast %c0_i32_16 : i32 to vector<2x8x128xi32>
    %43 = arith.cmpi sge, %40, %42 : vector<2x8x128xi32>
    %c16_i32_17 = arith.constant 16 : i32
    %44 = vector.broadcast %c16_i32_17 : i32 to vector<2x8x128xi32>
    %45 = arith.cmpi slt, %40, %44 : vector<2x8x128xi32>
    %46 = arith.andi %43, %45 : vector<2x8x128xi1>
    %c6_i32 = arith.constant 6 : i32
    %47 = vector.broadcast %c6_i32 : i32 to vector<2x8x128xi32>
    %48 = arith.select %46, %47, %41 : vector<2x8x128xi1>, vector<2x8x128xi32>
    %c16_i32_18 = arith.constant 16 : i32
    %49 = vector.broadcast %c16_i32_18 : i32 to vector<2x8x128xi32>
    %50 = arith.cmpi sge, %40, %49 : vector<2x8x128xi32>
    %c32_i32 = arith.constant 32 : i32
    %51 = vector.broadcast %c32_i32 : i32 to vector<2x8x128xi32>
    %52 = arith.cmpi slt, %40, %51 : vector<2x8x128xi32>
    %53 = arith.andi %50, %52 : vector<2x8x128xi1>
    %c5_i32 = arith.constant 5 : i32
    %54 = vector.broadcast %c5_i32 : i32 to vector<2x8x128xi32>
    %55 = arith.select %53, %54, %48 : vector<2x8x128xi1>, vector<2x8x128xi32>
    %c32_i32_19 = arith.constant 32 : i32
    %56 = vector.broadcast %c32_i32_19 : i32 to vector<2x8x128xi32>
    %57 = arith.cmpi sge, %40, %56 : vector<2x8x128xi32>
    %c48_i32 = arith.constant 48 : i32
    %58 = vector.broadcast %c48_i32 : i32 to vector<2x8x128xi32>
    %59 = arith.cmpi slt, %40, %58 : vector<2x8x128xi32>
    %60 = arith.andi %57, %59 : vector<2x8x128xi1>
    %c4_i32 = arith.constant 4 : i32
    %61 = vector.broadcast %c4_i32 : i32 to vector<2x8x128xi32>
    %62 = arith.select %60, %61, %55 : vector<2x8x128xi1>, vector<2x8x128xi32>
    %63 = arith.cmpi slt, %39, %62 : vector<2x8x128xi32>
    %cst_20 = arith.constant 0.000000e+00 : f32
    %64 = vector.broadcast %cst_20 : f32 to vector<2x8x128xf32>
    %65 = arith.select %63, %38, %64 : vector<2x8x128xi1>, vector<2x8x128xf32>
    %cst_21 = arith.constant dense<0xFF800000> : vector<2x128xf32>
    %66 = vector.multi_reduction <maximumf>, %65, %cst_21 [1] : vector<2x8x128xf32> to vector<2x128xf32>
    %c0_22 = arith.constant 0 : index
    %c0_23 = arith.constant 0 : index
    %67 = vector.load %arg5[%c0_22, %c0_23] : memref<2x128xf32, #tpu.memory_space<vmem>>, vector<2x128xf32>
    tpu.vector_store %arg5[%c0_22, %c0_23], %66 {strides = array<i32>} : memref<2x128xf32, #tpu.memory_space<vmem>>, vector<2x128xf32>,
    return
  }
  func.func @transform_1(%arg0: i32, %arg1: memref<16xi32, #tpu.memory_space<smem>>) -> (i32, i32) {
    %c0_i32 = arith.constant 0 : i32
    %c0_i32_0 = arith.constant 0 : i32
    %c0_i32_1 = arith.constant 0 : i32
    return %c0_i32, %c0_i32_0 : i32, i32
  }
  func.func @transform_2(%arg0: i32, %arg1: memref<16xi32, #tpu.memory_space<smem>>) -> (i32, i32) {
    %c0_i32 = arith.constant 0 : i32
    %c0_i32_0 = arith.constant 0 : i32
    %c0_i32_1 = arith.constant 0 : i32
    return %c0_i32, %c0_i32_0 : i32, i32
  }
  func.func @transform_3(%arg0: i32, %arg1: memref<16xi32, #tpu.memory_space<smem>>) -> (i32, i32) {
    %c0_i32 = arith.constant 0 : i32
    %c0_i32_0 = arith.constant 0 : i32
    return %arg0, %c0_i32 : i32, i32
  }
}

</mosaic_0001>

<llo_original>
// kernel: tpu_custom_call.1
$region0: #{tpu_custom_call.1}
  #allocation0 [shape = 'u32[]', space=smem, size = 0x4, offset = 0x4, fixed_abs, tag = 'smem constant byte address 0x4 - core index']
  #allocation1 [shape = 'u32[72,128]{1,0:T(1,128)}', space=vmem, size = 0x9000, scoped, tag = 'internal scratch']
  #allocation2 [shape = 'f32[16,32]{1,0:T(8,128)}', space=vmem, size = 0x2000, scoped, tag = 'scratch operand']
  #allocation3 [shape = 's32[2]{0}', space=sflag, size = 0x8, scoped, tag = 'scratch operand']
  #allocation4 [shape = 's32[1]{0}', space=sflag, size = 0x4, scoped, tag = 'scoped memory for tpu_custom_call.1']
  #allocation5 [shape = 'u8[512]{0}', space=smem, size = 0x200, scoped, tag = 'prefetched SMEM operand 0']
  #allocation8 [shape = 's32[]', space=sflag, size = 0x4, offset = 0, fixed_abs, tag = 'sflag constant byte address 0x0 - dummy sync flag']
  #allocation9 [shape = 's32[]', space=sflag, size = 0x4, offset = 0, fixed_abs, tag = 'sflag constant byte address 0x0 - dummy sync flag']
  %s0 = inlined_call_operand.vmem [shape: s32[16], index: 0, kind: input, shape index: {}]
  %s1 = inlined_call_operand.vmem [shape: f32[50,32], index: 1, kind: input, shape index: {}]
  %s2 = inlined_call_operand.vmem [shape: bf16[32,640], index: 2, kind: input, shape index: {}]
  %s3 = inlined_call_operand.vmem [shape: f32[1,128], index: 3, kind: input, shape index: {}]
  %s4 = inlined_call_operand.hbm [shape: f32[2,128], index: 4, kind: output, shape index: {}]
  %s5 = sld [smem:[#allocation0]]
  $region89: #{tpu_custom_call.1} parent=0
    _
  %s7 = ssub.s32 1, %s5
  %s8 = scalar_select 0, %s7, %s5
  %s10 = sshll.u32 %s0, 4
  %s11 = int_to_ptr.vmem [resolvable:$true] %s10
  %13 = dma.vmem_to_smem %s11, 16, [#allocation5], [#allocation4]
  %15 = dma.done [#allocation4], 16
  %16 = sfence
  $region1: #{tpu_custom_call.1} parent=0
    #allocation6 [shape = 'u8[1024]{0}', space=vmem, size = 0x400, scoped, tag = 'output window, operand 0, single buffered']
    #allocation7 [shape = 's32[1]{0}', space=sflag, size = 0x4, scoped, tag = 'scoped memory for tpu_custom_call.1']
    %17 = vsyncpa [#allocation7], 0
    // Predicated region
    $region2: #{tpu_custom_call.1} parent=1 // pred_check
      _
    $region3: #{tpu_custom_call.1} parent=1 // pred_check_branch
      %19 = sbr.rel (0) target = $region5
    $region4: #{tpu_custom_call.1} parent=1 // pred_region
      _
    $region5: #{tpu_custom_call.1} parent=1 // pred_fallthru
      _
    // Predicated region
    $region6: #{tpu_custom_call.1} parent=1 // pred_check
      _
    $region7: #{tpu_custom_call.1} parent=1 // pred_check_branch
      %21 = sbr.rel (0) target = $region9
    $region8: #{tpu_custom_call.1} parent=1 // pred_region
      _
    $region9: #{tpu_custom_call.1} parent=1 // pred_fallthru
      _
    %s23 = smul.u32 0, 16
    %s24 = sld [smem:[#allocation5 + %s23]]
    %s25 = scalar_lea.vmem %s1, %s24
    // Predicated region
    $region10: #{tpu_custom_call.1} parent=1 // pred_check
      _
    $region11: #{tpu_custom_call.1} parent=1 // pred_check_branch
      %27 = sbr.rel target = $region13
    $region12: #{tpu_custom_call.1} parent=1 // pred_region
      // Predicated region
      $region25: #{tpu_custom_call.1} parent=12 // pred_check
        _
      $region26: #{tpu_custom_call.1} parent=12 // pred_check_branch
        %43 = sbr.rel (0) target = $region28
      $region27: #{tpu_custom_call.1} parent=12 // pred_region
        %s45 = ssub.s32 2, 1
        loop: start=0, step=1, limit=1
        $region29: #{tpu_custom_call.1} parent=27 // loop_pre_header
          _
        $region30: #{tpu_custom_call.1} parent=27 // loop_header
          %s47 = sphi 0, %s51
          %p48 = scmp.ge.s32.totalorder %s47, 1
          %s52 = sphi %s25, %s25
          %s53 = sphi [#allocation2], [#allocation2]
        $region31: #{tpu_custom_call.1} parent=27 // loop_header_branch
          %50 = sbr.rel (%p48) target = $region35
        $region32: #{tpu_custom_call.1} parent=27 // loop_body
          %v54 = vld [vmem:[%s52] sm:%s45]
          %55 = vst [vmem:[%s53] sm:%s45] %v54
        $region33: #{tpu_custom_call.1} parent=27 // loop_footer
          %s51 = sadd.s32 1, %s47
        $region34: #{tpu_custom_call.1} parent=27 // loop_footer_branch
          %46 = sbr.rel target = $region30
        $region35: #{tpu_custom_call.1} parent=27 // loop_exit
          _
      $region28: #{tpu_custom_call.1} parent=12 // pred_fallthru
        _
    $region13: #{tpu_custom_call.1} parent=1 // pred_fallthru
      _
    // Predicated region
    $region14: #{tpu_custom_call.1} parent=1 // pred_check
      _
    $region15: #{tpu_custom_call.1} parent=1 // pred_check_branch
      %29 = sbr.rel (0) target = $region17
    $region16: #{tpu_custom_call.1} parent=1 // pred_region
      %s31 = ssub.s32 2, 1
      loop: start=0, step=1, limit=1
      $region18: #{tpu_custom_call.1} parent=16 // loop_pre_header
        _
      $region19: #{tpu_custom_call.1} parent=16 // loop_header
        %s33 = sphi 0, %s37
        %p34 = scmp.ge.s32.totalorder %s33, 1
        %s38 = sphi %s25, %s25
        %s39 = sphi [#allocation2], [#allocation2]
      $region20: #{tpu_custom_call.1} parent=16 // loop_header_branch
        %36 = sbr.rel (%p34) target = $region24
      $region21: #{tpu_custom_call.1} parent=16 // loop_body
        %v40 = vld [vmem:[%s38] sm:%s31]
        %41 = vst [vmem:[%s39] sm:%s31] %v40
      $region22: #{tpu_custom_call.1} parent=16 // loop_footer
        %s37 = sadd.s32 1, %s33
      $region23: #{tpu_custom_call.1} parent=16 // loop_footer_branch
        %32 = sbr.rel target = $region19
      $region24: #{tpu_custom_call.1} parent=16 // loop_exit
        _
    $region17: #{tpu_custom_call.1} parent=1 // pred_fallthru
      _
    // Predicated region
    $region36: #{tpu_custom_call.1} parent=1 // pred_check
      _
    $region37: #{tpu_custom_call.1} parent=1 // pred_check_branch
      %58 = sbr.rel (0) target = $region39
    $region38: #{tpu_custom_call.1} parent=1 // pred_region
      %59 = vsyncadd [#allocation3], 16
    $region39: #{tpu_custom_call.1} parent=1 // pred_fallthru
      _
    loop: start=0, step=1, limit=16
    $region40: #{tpu_custom_call.1} parent=1 // loop_pre_header
      _
    $region41: #{tpu_custom_call.1} parent=1 // loop_header
      %s61 = sphi 0, %s65
      %p62 = scmp.ge.s32.totalorder %s61, 16
    $region42: #{tpu_custom_call.1} parent=1 // loop_header_branch
      %64 = sbr.rel (%p62) target = $region46
    $region43: #{tpu_custom_call.1} parent=1 // loop_body
      %s66 = sand.u32 %s61, 1
      %s67 = sadd.s32 %s61, 1
      %p68 = scmp.lt.s32.totalorder %s67, 16
      // Predicated region
      $region47: #{tpu_custom_call.1} parent=43 // pred_check
        %p69 = pneg %p68
      $region48: #{tpu_custom_call.1} parent=43 // pred_check_branch
        %71 = sbr.rel (%p69) target = $region50
      $region49: #{tpu_custom_call.1} parent=43 // pred_region
        %s72 = sadd.s32 %s23, %s61
        %s73 = sadd.s32 %s72, 1
        %s74 = sld [smem:[#allocation5 + %s73]]
        %s75 = ssub.s32 1, %s66
        %s76 = scalar_lea.vmem %s1, %s74
        %s77 = scalar_lea.vmem [#allocation2], %s67
        %s78 = scalar_lea.sflag [#allocation3], %s75
        // Predicated region
        $region51: #{tpu_custom_call.1} parent=49 // pred_check
          _
        $region52: #{tpu_custom_call.1} parent=49 // pred_check_branch
          %80 = sbr.rel target = $region54
        $region53: #{tpu_custom_call.1} parent=49 // pred_region
          // Predicated region
          $region66: #{tpu_custom_call.1} parent=53 // pred_check
            _
          $region67: #{tpu_custom_call.1} parent=53 // pred_check_branch
            %96 = sbr.rel (0) target = $region69
          $region68: #{tpu_custom_call.1} parent=53 // pred_region
            %s98 = ssub.s32 2, 1
            loop: start=0, step=1, limit=1
            $region70: #{tpu_custom_call.1} parent=68 // loop_pre_header
              _
            $region71: #{tpu_custom_call.1} parent=68 // loop_header
              %s100 = sphi 0, %s104
              %p101 = scmp.ge.s32.totalorder %s100, 1
              %s105 = sphi %s76, %s76
              %s106 = sphi %s77, %s77
            $region72: #{tpu_custom_call.1} parent=68 // loop_header_branch
              %103 = sbr.rel (%p101) target = $region76
            $region73: #{tpu_custom_call.1} parent=68 // loop_body
              %v107 = vld [vmem:[%s105] sm:%s98]
              %108 = vst [vmem:[%s106] sm:%s98] %v107
            $region74: #{tpu_custom_call.1} parent=68 // loop_footer
              %s104 = sadd.s32 1, %s100
            $region75: #{tpu_custom_call.1} parent=68 // loop_footer_branch
              %99 = sbr.rel target = $region71
            $region76: #{tpu_custom_call.1} parent=68 // loop_exit
              _
          $region69: #{tpu_custom_call.1} parent=53 // pred_fallthru
            _
        $region54: #{tpu_custom_call.1} parent=49 // pred_fallthru
          _
        // Predicated region
        $region55: #{tpu_custom_call.1} parent=49 // pred_check
          _
        $region56: #{tpu_custom_call.1} parent=49 // pred_check_branch
          %82 = sbr.rel (0) target = $region58
        $region57: #{tpu_custom_call.1} parent=49 // pred_region
          %s84 = ssub.s32 2, 1
          loop: start=0, step=1, limit=1
          $region59: #{tpu_custom_call.1} parent=57 // loop_pre_header
            _
          $region60: #{tpu_custom_call.1} parent=57 // loop_header
            %s86 = sphi 0, %s90
            %p87 = scmp.ge.s32.totalorder %s86, 1
            %s91 = sphi %s76, %s76
            %s92 = sphi %s77, %s77
          $region61: #{tpu_custom_call.1} parent=57 // loop_header_branch
            %89 = sbr.rel (%p87) target = $region65
          $region62: #{tpu_custom_call.1} parent=57 // loop_body
            %v93 = vld [vmem:[%s91] sm:%s84]
            %94 = vst [vmem:[%s92] sm:%s84] %v93
          $region63: #{tpu_custom_call.1} parent=57 // loop_footer
            %s90 = sadd.s32 1, %s86
          $region64: #{tpu_custom_call.1} parent=57 // loop_footer_branch
            %85 = sbr.rel target = $region60
          $region65: #{tpu_custom_call.1} parent=57 // loop_exit
            _
        $region58: #{tpu_custom_call.1} parent=49 // pred_fallthru
          _
        // Predicated region
        $region77: #{tpu_custom_call.1} parent=49 // pred_check
          _
        $region78: #{tpu_custom_call.1} parent=49 // pred_check_branch
          %111 = sbr.rel (0) target = $region80
        $region79: #{tpu_custom_call.1} parent=49 // pred_region
          %112 = vsyncadd %s78, 16
        $region80: #{tpu_custom_call.1} parent=49 // pred_fallthru
          _
      $region50: #{tpu_custom_call.1} parent=43 // pred_fallthru
        _
      %s113 = scalar_lea.sflag [#allocation3], %s66
      %s114 = smul.u32 1, 1
      %s115 = sshll.u32 %s114, 4
      %116 = dma.done %s113, %s115
    $region44: #{tpu_custom_call.1} parent=1 // loop_footer
      %s65 = sadd.s32 1, %s61
    $region45: #{tpu_custom_call.1} parent=1 // loop_footer_branch
      %60 = sbr.rel target = $region41
    $region46: #{tpu_custom_call.1} parent=1 // loop_exit
      _
    %v117 = vld [vmem:[#allocation2] sm:$0xff]
    %v118 = vld [vmem:[#allocation2 + $0x8] sm:$0xff]
    %v119 = vpack.c.bf16 %v118, %v117
    %v120 = vld [vmem:[%s2] sm:$0xff]
    %v121 = vld [vmem:[%s2 + $0x8] sm:$0xff]
    %v122 = vld [vmem:[%s2 + $0x10] sm:$0xf]
    %v123 = vld [vmem:[%s2 + $0x14] sm:$0xff]
    %v124 = vld [vmem:[%s2 + $0x1c] sm:$0xff]
    %v125 = vld [vmem:[%s2 + $0x24] sm:$0xf]
    %v126 = vld [vmem:[%s2 + $0x28] sm:$0xff]
    %v127 = vld [vmem:[%s2 + $0x30] sm:$0xff]
    %v128 = vld [vmem:[%s2 + $0x38] sm:$0xf]
    %v129 = vld [vmem:[%s2 + $0x3c] sm:$0xff]
    %v130 = vld [vmem:[%s2 + $0x44] sm:$0xff]
    %v131 = vld [vmem:[%s2 + $0x4c] sm:$0xf]
    %v144 = vunpack.c.l.b16 %v120
    %v145 = vunpack.c.h.b16 %v120
    %v146 = vunpack.c.l.b16 %v121
    %v147 = vunpack.c.h.b16 %v121
    %v148 = vunpack.c.l.b16 %v122
    %v149 = vunpack.c.l.b16 %v123
    %v150 = vunpack.c.h.b16 %v123
    %v151 = vunpack.c.l.b16 %v124
    %v152 = vunpack.c.h.b16 %v124
    %v153 = vunpack.c.l.b16 %v125
    %v154 = vunpack.c.l.b16 %v126
    %v155 = vunpack.c.h.b16 %v126
    %v156 = vunpack.c.l.b16 %v127
    %v157 = vunpack.c.h.b16 %v127
    %v158 = vunpack.c.l.b16 %v128
    %v159 = vunpack.c.l.b16 %v129
    %v160 = vunpack.c.h.b16 %v129
    %v161 = vunpack.c.l.b16 %v130
    %v162 = vunpack.c.h.b16 %v130
    %v163 = vunpack.c.l.b16 %v131
    %v164 = vpack.c.b16 %v149, %v144
    %v165 = vpack.c.b16 %v150, %v145
    %v166 = vpack.c.b16 %v151, %v146
    %v167 = vpack.c.b16 %v152, %v147
    %v168 = vpack.c.b16 %v153, %v148
    %v169 = vpack.c.b16 %v159, %v154
    %v170 = vpack.c.b16 %v160, %v155
    %v171 = vpack.c.b16 %v161, %v156
    %v172 = vpack.c.b16 %v162, %v157
    %v173 = vpack.c.b16 %v163, %v158
    %vm184 = vcmask 261120
    %v186 = vsel %vm184, %v119, 0
    %188 = vmatpush.bf16.msra.mxu0 0
    %189 = vmatpush.bf16.msra.mxu0 0
    %190 = vmatpush.bf16.msra.mxu0 0
    %191 = vmatpush.bf16.msra.mxu0 0
    %192 = vmatpush.bf16.msra.mxu0 0
    %193 = vmatpush.bf16.msra.mxu0 0
    %194 = vmatpush.bf16.msra.mxu0 %v169
    %195 = vmatpush.bf16.msra.mxu0 %v164
    %196 = vmatmul.bf16.gmra.mxu0 %v186
    %v197 = vpop.f32.mrf.mxu0
    %v198 = vadd.f32 0.0, %v197
    %v199 = vpop.f32.mrf.mxu0
    %v200 = vadd.f32 0.0, %v199
    %201 = vdwg.mxu0
    %202 = vmatpush.bf16.msra.mxu0 0
    %203 = vmatpush.bf16.msra.mxu0 0
    %204 = vmatpush.bf16.msra.mxu0 0
    %205 = vmatpush.bf16.msra.mxu0 0
    %206 = vmatpush.bf16.msra.mxu0 0
    %207 = vmatpush.bf16.msra.mxu0 0
    %208 = vmatpush.bf16.msra.mxu0 %v170
    %209 = vmatpush.bf16.msra.mxu0 %v165
    %210 = vmatmul.bf16.gmra.mxu0 %v186
    %v211 = vpop.f32.mrf.mxu0
    %v212 = vadd.f32 0.0, %v211
    %v213 = vpop.f32.mrf.mxu0
    %v214 = vadd.f32 0.0, %v213
    %215 = vdwg.mxu0
    %216 = vmatpush.bf16.msra.mxu0 0
    %217 = vmatpush.bf16.msra.mxu0 0
    %218 = vmatpush.bf16.msra.mxu0 0
    %219 = vmatpush.bf16.msra.mxu0 0
    %220 = vmatpush.bf16.msra.mxu0 0
    %221 = vmatpush.bf16.msra.mxu0 0
    %222 = vmatpush.bf16.msra.mxu0 %v171
    %223 = vmatpush.bf16.msra.mxu0 %v166
    %224 = vmatmul.bf16.gmra.mxu0 %v186
    %v225 = vpop.f32.mrf.mxu0
    %v226 = vadd.f32 0.0, %v225
    %v227 = vpop.f32.mrf.mxu0
    %v228 = vadd.f32 0.0, %v227
    %229 = vdwg.mxu0
    %230 = vmatpush.bf16.msra.mxu0 0
    %231 = vmatpush.bf16.msra.mxu0 0
    %232 = vmatpush.bf16.msra.mxu0 0
    %233 = vmatpush.bf16.msra.mxu0 0
    %234 = vmatpush.bf16.msra.mxu0 0
    %235 = vmatpush.bf16.msra.mxu0 0
    %236 = vmatpush.bf16.msra.mxu0 %v172
    %237 = vmatpush.bf16.msra.mxu0 %v167
    %238 = vmatmul.bf16.gmra.mxu0 %v186
    %v239 = vpop.f32.mrf.mxu0
    %v240 = vadd.f32 0.0, %v239
    %v241 = vpop.f32.mrf.mxu0
    %v242 = vadd.f32 0.0, %v241
    %243 = vdwg.mxu0
    %244 = vmatpush.bf16.msra.mxu0 0
    %245 = vmatpush.bf16.msra.mxu0 0
    %246 = vmatpush.bf16.msra.mxu0 0
    %247 = vmatpush.bf16.msra.mxu0 0
    %248 = vmatpush.bf16.msra.mxu0 0
    %249 = vmatpush.bf16.msra.mxu0 0
    %250 = vmatpush.bf16.msra.mxu0 %v173
    %251 = vmatpush.bf16.msra.mxu0 %v168
    %252 = vmatmul.bf16.gmra.mxu0 %v186
    %v253 = vpop.f32.mrf.mxu0
    %v254 = vadd.f32 0.0, %v253
    %v255 = vpop.f32.mrf.mxu0
    %v256 = vadd.f32 0.0, %v255
    %257 = vdwg.mxu0
    %vm260 = vcmask 1046528
    %v261 = vrot.slane %v212, 1
    %v262 = vrot.slane %v214, 1
    %v263 = vsel %vm260, %v261, %v262
    %v266 = vsel %vm260, %v262, 0.0
    %v267 = vadd.f32 %v198, %v263
    %v268 = vadd.f32 %v200, %v266
    %vm271 = vcmask 1045504
    %v272 = vrot.slane %v226, 2
    %v273 = vrot.slane %v228, 2
    %v274 = vsel %vm271, %v272, %v273
    %v277 = vsel %vm271, %v273, 0.0
    %v278 = vadd.f32 %v267, %v274
    %v279 = vadd.f32 %v268, %v277
    %vm282 = vcmask 1044480
    %v283 = vrot.slane %v240, 3
    %v284 = vrot.slane %v242, 3
    %v285 = vsel %vm282, %v283, %v284
    %v288 = vsel %vm282, %v284, 0.0
    %v289 = vadd.f32 %v278, %v285
    %v290 = vadd.f32 %v279, %v288
    %vm293 = vcmask 1043456
    %v294 = vrot.slane %v254, 4
    %v295 = vrot.slane %v256, 4
    %v296 = vsel %vm293, %v294, %v295
    %v299 = vsel %vm293, %v295, 0.0
    %v300 = vadd.f32 %v289, %v296
    %v301 = vadd.f32 %v290, %v299
    %v302 = vld [vmem:[%s3] sm:$0x1]
    %v304 = vperm.slane %v302, 0
    %v306 = vadd.f32 %v300, %v304
    %v307 = vadd.f32 %v301, %v304
    %v308 = vmax.f32 %v306, 0.0
    %v309 = vmax.f32 %v307, 0.0
    %v310 = vlaneseq
    %v311 = vshrl.u32 %v310, 7
    %v312 = vlaneseq
    %v313 = vand.u32 %v312, 127
    %vm314 = vcmp.ge.s32.totalorder %v313, 0
    %vm315 = vcmp.lt.s32.totalorder %v313, 16
    %vm316 = vmand %vm314, %vm315
    %v317 = vsel %vm316, 6, 8
    %vm318 = vcmp.ge.s32.totalorder %v313, 16
    %vm319 = vcmp.lt.s32.totalorder %v313, 32
    %vm320 = vmand %vm318, %vm319
    %v321 = vsel %vm320, 5, %v317
    %vm322 = vcmp.ge.s32.totalorder %v313, 32
    %vm323 = vcmp.lt.s32.totalorder %v313, 48
    %vm324 = vmand %vm322, %vm323
    %v325 = vsel %vm324, 4, %v321
    %vm326 = vcmp.lt.s32.totalorder %v311, %v325
    %v327 = vsel %vm326, %v308, 0.0
    %v328 = vsel %vm326, %v309, 0.0
    %v329 = vrot.slane %v327, 4
    %v330 = vmax.f32 %v327, %v329
    %v331 = vrot.slane %v330, 2
    %v332 = vmax.f32 %v330, %v331
    %v333 = vrot.slane %v332, 1
    %v334 = vmax.f32 %v332, %v333
    %v335 = vrot.slane %v328, 4
    %v336 = vmax.f32 %v328, %v335
    %v337 = vrot.slane %v336, 2
    %v338 = vmax.f32 %v336, %v337
    %v339 = vrot.slane %v338, 1
    %v340 = vmax.f32 %v338, %v339
    %vm343 = vcmask 1041409
    %v344 = vsel %vm343, %v340, %v334
    %346 = vst [vmem:[#allocation6] sm:$0x3] %v344
    // Predicated region
    $region81: #{tpu_custom_call.1} parent=1 // pred_check
      _
    $region82: #{tpu_custom_call.1} parent=1 // pred_check_branch
      %348 = sbr.rel (0) target = $region84
    $region83: #{tpu_custom_call.1} parent=1 // pred_region
      %350 = vsyncadd [#allocation7], 0
      %s352 = sshll.u32 [#allocation6], 4
      %s353 = int_to_ptr.vmem [resolvable:$true] %s352
      %s354 = sshll.u32 %s4, 4
      %s355 = int_to_ptr.hbm [resolvable:$true] %s354
      %357 = dma.vmem_to_hbm [thread:$0]  %s353, 32, %s355, [#allocation7]
    $region84: #{tpu_custom_call.1} parent=1 // pred_fallthru
      _
    // Predicated region
    $region85: #{tpu_custom_call.1} parent=1 // pred_check
      _
    $region86: #{tpu_custom_call.1} parent=1 // pred_check_branch
      %359 = sbr.rel (0) target = $region88
    $region87: #{tpu_custom_call.1} parent=1 // pred_region
      %361 = dma.done [#allocation7], 32
    $region88: #{tpu_custom_call.1} parent=1 // pred_fallthru
      _
    %362 = vsyncpa [#allocation7], 1
  %363 = vsyncmov [#allocation3]
  %s364 = vpop.sfrf %363
  %p365 = scmp.eq.s32.totalorder %s364, 0
  %p366 = pneg %p365
  %368 = shalt.err (%p366)
  %s369 = scalar_lea.sflag [#allocation3], 1
  %370 = vsyncmov %s369
  %s371 = vpop.sfrf %370
  %p372 = scmp.eq.s32.totalorder %s371, 0
  %p373 = pneg %p372
  %375 = shalt.err (%p373)

</llo_original>
